<compile_context>
chip_gen: v5e
topology: v5e:2x2
jax: 0.10.0
libtpu: 0.0.40
codegen_flags: <defaults>
</compile_context>

<pallas_src>
import functools

import jax
import jax.numpy as jnp
from jax import lax
from jax.experimental import pallas as pl
from jax.experimental.pallas import tpu as pltpu

_LANES = 128
_SUBLANES = 8
_MAX_TILE_ROWS = 2048        # 2048 * 128 * 4B = 1 MiB per input per pipeline buffer
_EPS = 1e-7


def _round_up(x, m):
    return -(-x // m) * m


def _sigmoid(x):
    # sigmoid(x) == 0.5 * tanh(0.5 * x) + 0.5  -> a single EUP push per vreg
    # (the exp + reciprocal formulation costs two).
    return 0.5 * jnp.tanh(0.5 * x) + 0.5


def _jaccard_partial_kernel(pr_ref, gt_ref, out_ref, *, tile_rows, rows_total,
                            n_tiles):
    """Per-tile partial sums written as three (8, 128) vreg-shaped slabs.

    out_ref block: (1, 3, 8, 128) f32
      [0, 0] = partial sum of sigmoid(pr) * gt
      [0, 1] = partial sum of sigmoid(pr)
      [0, 2] = partial sum of gt
    """
    zeros = jnp.zeros((_SUBLANES, _LANES), jnp.float32)

    def load(g):
        r = pl.multiple_of(g * _SUBLANES, _SUBLANES)
        p = _sigmoid(pr_ref[pl.ds(r, _SUBLANES), :].astype(jnp.float32))
        t = gt_ref[pl.ds(r, _SUBLANES), :].astype(jnp.float32)
        return p, t

    def body(g, carry):
        a_pg, a_p, a_g = carry
        p, t = load(g)
        return a_pg + p * t, a_p + p, a_g + t

    def store(acc):
        out_ref[0, 0, :, :] = acc[0]
        out_ref[0, 1, :, :] = acc[1]
        out_ref[0, 2, :, :] = acc[2]

    def full_tile():
        n_groups = tile_rows // _SUBLANES
        store(lax.fori_loop(0, n_groups, body, (zeros, zeros, zeros),
                            unroll=max(1, min(8, n_groups))))

    # Rows of the input that land in the last grid block (static Python int).
    last_rows = rows_total - (n_tiles - 1) * tile_rows

    if last_rows == tile_rows:
        # Every block is full: pure unmasked streaming pass.
        full_tile()
    else:
        is_last = pl.program_id(0) == n_tiles - 1

        @pl.when(jnp.logical_not(is_last))
        def _():
            full_tile()

        @pl.when(is_last)            # cold path: only the ragged final block
        def _():
            full_g = last_rows // _SUBLANES            # static
            rem = last_rows - full_g * _SUBLANES       # static, 0..7
            acc = lax.fori_loop(0, full_g, body, (zeros, zeros, zeros),
                                unroll=max(1, min(8, full_g)))
            if rem:
                p, t = load(full_g)
                row = lax.broadcasted_iota(jnp.int32, (_SUBLANES, _LANES), 0)
                keep = row < rem
                # jnp.where (not a multiply) so unspecified out-of-bounds data
                # in the partial block (possibly NaN) cannot leak into the sums.
                p = jnp.where(keep, p, 0.0)
                t = jnp.where(keep, t, 0.0)
                acc = (acc[0] + p * t, acc[1] + p, acc[2] + t)
            store(acc)


@jax.jit
def jaccard_loss(y_pr, y_gt):
    """1 - soft Jaccard index, sigmoid activation, eps=1e-7. Returns f32 scalar.

    Inputs may be any float/int/bool dtype (cast to f32 inside the kernel);
    passing gt as bool/uint8 and logits as bf16 cuts HBM traffic directly.
    """
    assert y_pr.shape == y_gt.shape
    n = y_pr.size
    pr_flat = jnp.ravel(y_pr)
    gt_flat = jnp.ravel(y_gt)

    rows = n // _LANES                              # complete 128-lane rows
    inter = jnp.float32(0.0)
    sum_p = jnp.float32(0.0)
    sum_g = jnp.float32(0.0)

    if rows > 0:
        # Tile size: as large as comfortably fits VMEM, but split so the
        # ("parallel") grid has >= 2 steps when there is enough work, letting
        # both v7x TensorCores stream concurrently.
        tile_rows = min(_MAX_TILE_ROWS, _round_up(rows, _SUBLANES))
        if rows > _SUBLANES and -(-rows // tile_rows) < 2:
            tile_rows = max(_SUBLANES, _round_up(-(-rows // 2), _SUBLANES))
        n_tiles = -(-rows // tile_rows)

        # No padding / full-array copies: when n % 128 == 0 (the typical case)
        # the slice is the identity and the reshape is a free bitcast; any
        # ragged final grid block is masked inside the kernel instead.
        main = rows * _LANES
        pr2d = pr_flat[:main].reshape(rows, _LANES)
        gt2d = gt_flat[:main].reshape(rows, _LANES)

        kernel = functools.partial(
            _jaccard_partial_kernel,
            tile_rows=tile_rows, rows_total=rows, n_tiles=n_tiles)

        partials = pl.pallas_call(
            kernel,
            out_shape=jax.ShapeDtypeStruct(
                (n_tiles, 3, _SUBLANES, _LANES), jnp.float32),
            grid=(n_tiles,),
            in_specs=[
                pl.BlockSpec((tile_rows, _LANES), lambda i: (i, 0)),
                pl.BlockSpec((tile_rows, _LANES), lambda i: (i, 0)),
            ],
            out_specs=pl.BlockSpec((1, 3, _SUBLANES, _LANES),
                                   lambda i: (i, 0, 0, 0)),
            compiler_params=pltpu.CompilerParams(
                dimension_semantics=("parallel",)),
        )(pr2d, gt2d)

        # Tiny (n_tiles, 3, 8, 128) partials reduced in plain JAX.
        sums = jnp.sum(partials, axis=(0, 2, 3))
        inter, sum_p, sum_g = sums[0], sums[1], sums[2]

    tail = n - rows * _LANES                        # < 128 leftover elements
    if tail:
        # TODO(synk): the sub-128-element remainder is reduced in plain JAX
        # (negligible work; keeps the kernel free of 1-D / sub-lane layouts).
        p_t = jax.nn.sigmoid(pr_flat[rows * _LANES:].astype(jnp.float32))
        g_t = gt_flat[rows * _LANES:].astype(jnp.float32)
        inter = inter + jnp.sum(p_t * g_t)
        sum_p = sum_p + jnp.sum(p_t)
        sum_g = sum_g + jnp.sum(g_t)

    union = sum_p + sum_g - inter + _EPS
    return 1.0 - (inter + _EPS) / union


def _jaccard_loss_ref(y_pr, y_gt, eps=_EPS):
    p = jax.nn.sigmoid(y_pr.astype(jnp.float32))
    g = y_gt.astype(jnp.float32)
    inter = jnp.sum(p * g)
    union = jnp.sum(g) + jnp.sum(p) - inter + eps
    return 1.0 - (inter + eps) / union


if __name__ == "__main__":
    key = jax.random.PRNGKey(0)
    k1, k2 = jax.random.split(key)
    # NCHW logits and binary ground-truth mask
    y_pr = jax.random.normal(k1, (2, 4, 16, 16), dtype=jnp.float32)
    y_gt = (jax.random.uniform(k2, (2, 4, 16, 16)) > 0.5).astype(jnp.float32)

    loss = jaccard_loss(y_pr, y_gt)
    jax.block_until_ready(loss)

    ref = _jaccard_loss_ref(y_pr, y_gt)
    assert jnp.allclose(loss, ref, atol=1e-5, rtol=1e-5), (loss, ref)
    print("KERNEL_OK")
</pallas_src>

<mosaic_0001>
module attributes {stable_mosaic.version = 11 : i64} {
  func.func @_jaccard_partial_kernel(%arg0: i32, %arg1: memref<8x128xf32, #tpu.memory_space<vmem>>, %arg2: memref<8x128xf32, #tpu.memory_space<vmem>>, %arg3: memref<1x3x8x128xf32, #tpu.memory_space<vmem>>) attributes {dimension_semantics = [#tpu.dimension_semantics<parallel>], iteration_bounds = array<i64: 2>, scalar_prefetch = 0 : i64, scratch_operands = 0 : i64, tpu.core_type = #tpu.core_type<tc>, window_params = [{transform_indices = @transform_0, window_bounds = array<i64: 8, 128>}, {transform_indices = @transform_1, window_bounds = array<i64: 8, 128>}, {transform_indices = @transform_2, window_bounds = array<i64: 1, 3, 8, 128>}]} {
    %cst = arith.constant 0.000000e+00 : f32
    %0 = vector.broadcast %cst : f32 to vector<8x128xf32>
    %c0_i32 = arith.constant 0 : i32
    %c8_i32 = arith.constant 8 : i32
    %1 = arith.muli %c0_i32, %c8_i32 : i32
    %2 = tpu.assume_multiple %1, 8 : i32
    %3 = arith.index_cast %2 : i32 to index
    %c0 = arith.constant 0 : index
    %4 = vector.load %arg1[%3, %c0] : memref<8x128xf32, #tpu.memory_space<vmem>>, vector<8x128xf32>
    %cst_0 = arith.constant 5.000000e-01 : f32
    %5 = vector.broadcast %cst_0 : f32 to vector<8x128xf32>
    %6 = arith.mulf %5, %4 : vector<8x128xf32>
    %7 = math.tanh %6 : vector<8x128xf32>
    %cst_1 = arith.constant 5.000000e-01 : f32
    %8 = vector.broadcast %cst_1 : f32 to vector<8x128xf32>
    %9 = arith.mulf %8, %7 : vector<8x128xf32>
    %cst_2 = arith.constant 5.000000e-01 : f32
    %10 = vector.broadcast %cst_2 : f32 to vector<8x128xf32>
    %11 = arith.addf %9, %10 : vector<8x128xf32>
    %12 = arith.index_cast %2 : i32 to index
    %c0_3 = arith.constant 0 : index
    %13 = vector.load %arg2[%12, %c0_3] : memref<8x128xf32, #tpu.memory_space<vmem>>, vector<8x128xf32>
    %14 = arith.mulf %11, %13 : vector<8x128xf32>
    %15 = arith.addf %0, %14 : vector<8x128xf32>
    %16 = arith.addf %0, %11 : vector<8x128xf32>
    %17 = arith.addf %0, %13 : vector<8x128xf32>
    %c1_i32 = arith.constant 1 : i32
    %c0_4 = arith.constant 0 : index
    %c0_5 = arith.constant 0 : index
    %c0_6 = arith.constant 0 : index
    %c0_7 = arith.constant 0 : index
    %18 = vector.load %arg3[%c0_4, %c0_5, %c0_6, %c0_7] : memref<1x3x8x128xf32, #tpu.memory_space<vmem>>, vector<1x1x8x128xf32>
    %19 = vector.shape_cast %18 : vector<1x1x8x128xf32> to vector<8x128xf32>
    %20 = vector.shape_cast %15 : vector<8x128xf32> to vector<1x1x8x128xf32>
    tpu.vector_store %arg3[%c0_4, %c0_5, %c0_6, %c0_7], %20 {strides = array<i32>} : memref<1x3x8x128xf32, #tpu.memory_space<vmem>>, vector<1x1x8x128xf32>,
    %c0_8 = arith.constant 0 : index
    %c1 = arith.constant 1 : index
    %c0_9 = arith.constant 0 : index
    %c0_10 = arith.constant 0 : index
    %21 = vector.load %arg3[%c0_8, %c1, %c0_9, %c0_10] : memref<1x3x8x128xf32, #tpu.memory_space<vmem>>, vector<1x1x8x128xf32>
    %22 = vector.shape_cast %21 : vector<1x1x8x128xf32> to vector<8x128xf32>
    %23 = vector.shape_cast %16 : vector<8x128xf32> to vector<1x1x8x128xf32>
    tpu.vector_store %arg3[%c0_8, %c1, %c0_9, %c0_10], %23 {strides = array<i32>} : memref<1x3x8x128xf32, #tpu.memory_space<vmem>>, vector<1x1x8x128xf32>,
    %c0_11 = arith.constant 0 : index
    %c2 = arith.constant 2 : index
    %c0_12 = arith.constant 0 : index
    %c0_13 = arith.constant 0 : index
    %24 = vector.load %arg3[%c0_11, %c2, %c0_12, %c0_13] : memref<1x3x8x128xf32, #tpu.memory_space<vmem>>, vector<1x1x8x128xf32>
    %25 = vector.shape_cast %24 : vector<1x1x8x128xf32> to vector<8x128xf32>
    %26 = vector.shape_cast %17 : vector<8x128xf32> to vector<1x1x8x128xf32>
    tpu.vector_store %arg3[%c0_11, %c2, %c0_12, %c0_13], %26 {strides = array<i32>} : memref<1x3x8x128xf32, #tpu.memory_space<vmem>>, vector<1x1x8x128xf32>,
    return
  }
  func.func @transform_0(%arg0: i32) -> (i32, i32) {
    %c0_i32 = arith.constant 0 : i32
    %c0_i32_0 = arith.constant 0 : i32
    return %arg0, %c0_i32 : i32, i32
  }
  func.func @transform_1(%arg0: i32) -> (i32, i32) {
    %c0_i32 = arith.constant 0 : i32
    %c0_i32_0 = arith.constant 0 : i32
    return %arg0, %c0_i32 : i32, i32
  }
  func.func @transform_2(%arg0: i32) -> (i32, i32, i32, i32) {
    %c0_i32 = arith.constant 0 : i32
    %c0_i32_0 = arith.constant 0 : i32
    %c0_i32_1 = arith.constant 0 : i32
    %c0_i32_2 = arith.constant 0 : i32
    return %arg0, %c0_i32, %c0_i32_0, %c0_i32_1 : i32, i32, i32, i32
  }
}

</mosaic_0001>

<llo_original>
// kernel: jaccard_loss.1
$region0: #{jaccard_loss.1}
  #allocation0 [shape = 'u32[]', space=smem, size = 0x4, offset = 0x4, fixed_abs, tag = 'smem constant byte address 0x4 - core index']
  #allocation1 [shape = 'u32[72,128]{1,0:T(1,128)}', space=vmem, size = 0x9000, scoped, tag = 'internal scratch']
  %s0 = inlined_call_operand.vmem [shape: f32[16,128], index: 0, kind: input, shape index: {}]
  %s1 = inlined_call_operand.vmem [shape: f32[16,128], index: 1, kind: input, shape index: {}]
  %s2 = inlined_call_operand.vmem [shape: f32[2,3,8,128], index: 2, kind: output, shape index: {}]
  %s3 = sld [smem:[#allocation0]]
  $region41: #{jaccard_loss.1} parent=0
    _
  %s5 = ssub.s32 1, %s3
  %s6 = scalar_select 0, %s5, %s3
  loop: start=0, step=1, limit=4
  $region2: #{jaccard_loss.1} parent=0 // loop_pre_header
    _
  $region3: #{jaccard_loss.1} parent=0 // loop_header
    %s8 = sphi 0, %s12
    %p9 = scmp.ge.s32.totalorder %s8, 4
    %s18 = sphi 0, %s20
    %s21 = sphi 0, %s18
    %s22 = sphi 0, %s21
    %s38 = sphi 0, %s22
    %s44 = sphi 0, %s46
    %s47 = sphi 0, %s44
    %s48 = sphi 0, %s47
    %s64 = sphi 0, %s48
    %s70 = sphi 0, %s72
    %s73 = sphi 0, %s70
    %s74 = sphi 0, %s73
    %s90 = sphi 0, %s74
  $region4: #{jaccard_loss.1} parent=0 // loop_header_branch
    %11 = sbr.rel (%p9) target = $region8
  $region5: #{jaccard_loss.1} parent=0 // loop_body
    %s13 = ssub.s32 %s8, 1
    %s14 = ssub.s32 %s8, 2
    %s15 = sadd.s32 %s8, 1
    %s16 = ssub.s32 %s8, %s15
    %p17 = scmp.eq.s32.totalorder %s16, 0
    %s19 = sadd.s32 %s18, 1
    %s20 = scalar_select %p17, %s18, %s19
    %p23 = pneg %p17
    %p24 = scmp.eq.s32.totalorder %s8, 1
    %p25 = por %p23, %p24
    %p26 = scmp.ne.s32.totalorder %s18, %s21
    %p27 = scmp.eq.s32.totalorder %s8, 0
    %p28 = por %p26, %p27
    %p29 = scmp.ne.s32.totalorder %s18, %s21
    %p30 = scmp.eq.s32.totalorder %s13, 1
    %p31 = por %p29, %p30
    %p32 = scmp.ne.s32.totalorder %s21, %s22
    %p33 = scmp.eq.s32.totalorder %s13, 0
    %p34 = por %p32, %p33
    %p35 = scmp.ne.s32.totalorder %s21, %s22
    %p36 = scmp.eq.s32.totalorder %s14, 1
    %p37 = por %p35, %p36
    %p39 = scmp.ne.s32.totalorder %s22, %s38
    %p40 = scmp.eq.s32.totalorder %s14, 0
    %p41 = por %p39, %p40
    %s42 = ssub.s32 %s8, %s15
    %p43 = scmp.eq.s32.totalorder %s42, 0
    %s45 = sadd.s32 %s44, 1
    %s46 = scalar_select %p43, %s44, %s45
    %p49 = pneg %p43
    %p50 = scmp.eq.s32.totalorder %s8, 1
    %p51 = por %p49, %p50
    %p52 = scmp.ne.s32.totalorder %s44, %s47
    %p53 = scmp.eq.s32.totalorder %s8, 0
    %p54 = por %p52, %p53
    %p55 = scmp.ne.s32.totalorder %s44, %s47
    %p56 = scmp.eq.s32.totalorder %s13, 1
    %p57 = por %p55, %p56
    %p58 = scmp.ne.s32.totalorder %s47, %s48
    %p59 = scmp.eq.s32.totalorder %s13, 0
    %p60 = por %p58, %p59
    %p61 = scmp.ne.s32.totalorder %s47, %s48
    %p62 = scmp.eq.s32.totalorder %s14, 1
    %p63 = por %p61, %p62
    %p65 = scmp.ne.s32.totalorder %s48, %s64
    %p66 = scmp.eq.s32.totalorder %s14, 0
    %p67 = por %p65, %p66
    %s68 = ssub.s32 %s8, %s15
    %p69 = scmp.eq.s32.totalorder %s68, 0
    %s71 = sadd.s32 %s70, 1
    %s72 = scalar_select %p69, %s70, %s71
    %p75 = pneg %p69
    %p76 = scmp.eq.s32.totalorder %s8, 1
    %p77 = por %p75, %p76
    %p78 = scmp.ne.s32.totalorder %s70, %s73
    %p79 = scmp.eq.s32.totalorder %s8, 0
    %p80 = por %p78, %p79
    %p81 = scmp.ne.s32.totalorder %s70, %s73
    %p82 = scmp.eq.s32.totalorder %s13, 1
    %p83 = por %p81, %p82
    %p84 = scmp.ne.s32.totalorder %s73, %s74
    %p85 = scmp.eq.s32.totalorder %s13, 0
    %p86 = por %p84, %p85
    %p87 = scmp.ne.s32.totalorder %s73, %s74
    %p88 = scmp.eq.s32.totalorder %s14, 1
    %p89 = por %p87, %p88
    %p91 = scmp.ne.s32.totalorder %s74, %s90
    %p92 = scmp.eq.s32.totalorder %s14, 0
    %p93 = por %p91, %p92
    %p94 = scmp.le.s32.totalorder 1, %s8
    %p95 = scmp.lt.s32.totalorder %s8, 3
    %p96 = pnand %p94, %p95
    %p97 = pneg %p96
    // Predicated region
    $region9: #{jaccard_loss.1} parent=5 // pred_check
      _
    $region10: #{jaccard_loss.1} parent=5 // pred_check_branch
      %99 = sbr.rel (%p96) target = $region12
    $region11: #{jaccard_loss.1} parent=5 // pred_region
      %s100 = ssub.s32 %s8, 1
    $region12: #{jaccard_loss.1} parent=5 // pred_fallthru
      _
    %p101 = scmp.lt.s32.totalorder %s8, 2
    // Predicated region
    $region13: #{jaccard_loss.1} parent=5 // pred_check
      %p102 = pneg %p101
    $region14: #{jaccard_loss.1} parent=5 // pred_check_branch
      %104 = sbr.rel (%p102) target = $region16
    $region15: #{jaccard_loss.1} parent=5 // pred_region
      // Predicated region
      $region17: #{jaccard_loss.1} parent=15 // pred_check
        %p105 = pneg %p28
      $region18: #{jaccard_loss.1} parent=15 // pred_check_branch
        %107 = sbr.rel (%p105) target = $region20
      $region19: #{jaccard_loss.1} parent=15 // pred_region
        %p108 = scmp.lt.s32.totalorder %s8, 1
        %s109 = scalar_select %p108, %s8, 1
        %s110 = smul.addr %s109, 8
        %s111 = scalar_lea.vmem %s0, %s110
      $region20: #{jaccard_loss.1} parent=15 // pred_fallthru
        _
      // Predicated region
      $region21: #{jaccard_loss.1} parent=15 // pred_check
        %p112 = pneg %p54
      $region22: #{jaccard_loss.1} parent=15 // pred_check_branch
        %114 = sbr.rel (%p112) target = $region24
      $region23: #{jaccard_loss.1} parent=15 // pred_region
        %p115 = scmp.lt.s32.totalorder %s8, 1
        %s116 = scalar_select %p115, %s8, 1
        %s117 = smul.addr %s116, 8
        %s118 = scalar_lea.vmem %s1, %s117
      $region24: #{jaccard_loss.1} parent=15 // pred_fallthru
        _
    $region16: #{jaccard_loss.1} parent=5 // pred_fallthru
      _
    %p119 = scmp.le.s32.totalorder 1, %s8
    %p120 = scmp.lt.s32.totalorder %s8, 3
    %p121 = pnand %p119, %p120
    %p122 = pneg %p121
    // Predicated region
    $region25: #{jaccard_loss.1} parent=5 // pred_check
      _
    $region26: #{jaccard_loss.1} parent=5 // pred_check_branch
      %124 = sbr.rel (%p121) target = $region28
    $region27: #{jaccard_loss.1} parent=5 // pred_region
      %s125 = ssub.s32 %s8, 1
      %p126 = scmp.lt.s32.totalorder %s13, 1
      %s127 = scalar_select %p126, %s13, 1
      %s128 = smul.addr %s127, 8
      %s129 = scalar_lea.vmem %s0, %s128
      %p130 = pneg %p34
      %p131 = pneg %p31
      %p132 = scmp.lt.s32.totalorder %s13, 1
      %s133 = scalar_select %p132, %s13, 1
      %s134 = smul.addr %s133, 8
      %s135 = scalar_lea.vmem %s1, %s134
      %p136 = pneg %p60
      %p137 = pneg %p57
      %p138 = pneg %p86
      %p139 = pneg %p83
      %p140 = scmp.lt.s32.totalorder %s13, 1
      %s141 = scalar_select %p140, %s13, 1
      %s142 = smul.addr %s141, 3
      %s143 = smul.addr %s142, 8
      %s144 = scalar_lea.vmem %s2, %s143
      %p145 = scmp.lt.s32.totalorder %s13, 1
      %s146 = scalar_select %p145, %s13, 1
      %s147 = smul.addr %s146, 8
      %s148 = scalar_lea.vmem %s0, %s147
      %p149 = scmp.lt.s32.totalorder %s13, 1
      %s150 = scalar_select %p149, %s13, 1
      %s151 = smul.addr %s150, 8
      %s152 = scalar_lea.vmem %s1, %s151
      %p153 = scmp.lt.s32.totalorder %s13, 1
      %s154 = scalar_select %p153, %s13, 1
      %s155 = smul.addr %s154, 3
      %s156 = smul.addr %s155, 8
      %s157 = scalar_lea.vmem %s2, %s156
      %v158 = vld [vmem:[%s148] sm:$0xff]
      %v159 = vmul.f32 %v158, 0.5
      %v160 = vtanh.pop %v159
      %v161 = vmul.f32 %v160, 0.5
      %v162 = vadd.f32 %v161, 0.5
      %v163 = vld [vmem:[%s152] sm:$0xff]
      %v164 = vmul.f32 %v162, %v163
      %v165 = vadd.f32 %v164, 0.0
      %v166 = vadd.f32 %v162, 0.0
      %v167 = vadd.f32 %v163, 0.0
      %168 = vst [vmem:[%s157] sm:$0xff] %v165
      %s169 = scalar_lea.vmem %s157, 8
      %170 = vst [vmem:[%s169] sm:$0xff] %v166
      %s171 = scalar_lea.vmem %s157, 16
      %172 = vst [vmem:[%s171] sm:$0xff] %v167
      %p173 = scmp.lt.s32.totalorder %s13, 1
      %s174 = scalar_select %p173, %s13, 1
      %s175 = smul.addr %s174, 3
      %s176 = smul.addr %s175, 8
      %s177 = scalar_lea.vmem %s2, %s176
      // Predicated region
      $region29: #{jaccard_loss.1} parent=27 // pred_check
        %p178 = pneg %p83
      $region30: #{jaccard_loss.1} parent=27 // pred_check_branch
        %180 = sbr.rel (%p178) target = $region32
      $region31: #{jaccard_loss.1} parent=27 // pred_region
        _
      $region32: #{jaccard_loss.1} parent=27 // pred_fallthru
        _
    $region28: #{jaccard_loss.1} parent=5 // pred_fallthru
      _
    %p181 = scmp.le.s32.totalorder 2, %s8
    // Predicated region
    $region33: #{jaccard_loss.1} parent=5 // pred_check
      %p182 = pneg %p181
    $region34: #{jaccard_loss.1} parent=5 // pred_check_branch
      %184 = sbr.rel (%p182) target = $region36
    $region35: #{jaccard_loss.1} parent=5 // pred_region
      %s185 = ssub.s32 %s8, 2
      // Predicated region
      $region37: #{jaccard_loss.1} parent=35 // pred_check
        %p186 = pneg %p89
      $region38: #{jaccard_loss.1} parent=35 // pred_check_branch
        %188 = sbr.rel (%p186) target = $region40
      $region39: #{jaccard_loss.1} parent=35 // pred_region
        %p189 = scmp.lt.s32.totalorder %s14, 1
        %s190 = scalar_select %p189, %s14, 1
        %s191 = smul.addr %s190, 3
        %s192 = smul.addr %s191, 8
        %s193 = scalar_lea.vmem %s2, %s192
      $region40: #{jaccard_loss.1} parent=35 // pred_fallthru
        _
    $region36: #{jaccard_loss.1} parent=5 // pred_fallthru
      _
  $region6: #{jaccard_loss.1} parent=0 // loop_footer
    %s12 = sadd.s32 1, %s8
  $region7: #{jaccard_loss.1} parent=0 // loop_footer_branch
    %7 = sbr.rel target = $region3
  $region8: #{jaccard_loss.1} parent=0 // loop_exit
    _

</llo_original>
